<compile_context>
chip_gen: v6e
topology: v6e:2x2x1
jax: 0.10.0
libtpu: 0.0.40
codegen_flags: <defaults>
</compile_context>

<pallas_src>
import functools

import jax
import jax.numpy as jnp
from jax.experimental import pallas as pl
from jax.experimental.pallas import tpu as pltpu

_MIB = 1024 * 1024


def _round_up(x, m):
    return ((x + m - 1) // m) * m


def _cdiv(a, b):
    return (a + b - 1) // b


def _resident_spec(block_shape, index_map):
    """BlockSpec for operands with a constant index_map (fetched once, resident).

    Single-buffering (pl.Buffered(1)) halves their VMEM footprint vs the default
    double-buffered pipeline; they never change across grid steps so there is
    nothing to prefetch.
    """
    try:
        return pl.BlockSpec(block_shape, index_map, pipeline_mode=pl.Buffered(1))
    except TypeError:
        # Older jax without pipeline_mode: fall back to default double-buffering.
        return pl.BlockSpec(block_shape, index_map)


def _vmem_defaults():
    """Generation-aware (tile budget, scoped limit) in bytes.

    128 MiB VMEM parts (v5e/v6e) -> ~104 / 120 MiB; 64 MiB parts (v7x) ->
    ~40 / 56 MiB.  Falls back to the conservative v7x-sized numbers if the
    hardware query is unavailable.
    """
    try:
        cap = int(pltpu.get_tpu_info().vmem_capacity_bytes)
    except Exception:
        cap = 64 * _MIB
    if cap <= 0:
        cap = 64 * _MIB
    budget = max(32 * _MIB, cap - 24 * _MIB)
    limit = min(cap, budget + 16 * _MIB)
    return budget, limit


# ---------------------------------------------------------------------------
# Parameter preparation (one-time, hoisted out of the per-forward path).
# ---------------------------------------------------------------------------
def prepare_qkv_params(weight, bias, qk_dim, *, compute_dtype=None):
    """weight: (2*qk_dim + dim, dim) in PyTorch nn.Linear layout; bias or None.

    Returns (w, b, qk_dim): the weight transposed ONCE into a fused
    (dim, out_dim) q|kv slab (optionally cast to compute_dtype, e.g. bf16) and
    the bias pre-cast to an f32 row.
    """
    out_dim, dim = weight.shape
    qk_dim = int(qk_dim)
    assert out_dim == 2 * qk_dim + dim, "QKVLinear expects out_dim = 2*qk_dim + dim"
    w_dtype = compute_dtype if compute_dtype is not None else weight.dtype
    if bias is None:
        bias = jnp.zeros((out_dim,), jnp.float32)
    w = jnp.asarray(weight, dtype=w_dtype).T                      # (dim, out_dim)
    b = jnp.asarray(bias, dtype=jnp.float32).reshape(1, out_dim)  # (1, out_dim)
    return w, b, qk_dim


# ---------------------------------------------------------------------------
# Kernels
# ---------------------------------------------------------------------------
def _qkv_fused_kernel(x_ref, w_ref, b_ref, q_ref, kv_ref, *, qk_dim):
    # x_ref : (tm, dim)        streamed row tile
    # w_ref : (dim, out_dim)   resident, single-buffered
    # b_ref : (1, out_dim) f32 resident, single-buffered
    # q_ref : (tm, qk_dim)     lane-dense output tile
    # kv_ref: (tm, kv_dim)     lane-dense output tile
    x = x_ref[...]
    if x.dtype != w_ref.dtype:
        x = x.astype(w_ref.dtype)   # in-kernel cast: no extra wrapper-side HBM pass
    # One fused matmul keeps the 256-wide MXU full even when qk_dim is only 128.
    y = jnp.dot(x, w_ref[...], preferred_element_type=jnp.float32) + b_ref[...]
    q_ref[...] = y[:, :qk_dim].astype(q_ref.dtype)
    kv_ref[...] = y[:, qk_dim:].astype(kv_ref.dtype)


def _qkv_ktiled_kernel(x_ref, w_ref, b_ref, q_ref, kv_ref, acc_ref, *, qk_dim):
    # Fallback when the weight slab is too large to keep resident in VMEM:
    # grid = (row tiles, K tiles); weights stream as (tk, out_dim) slabs and
    # partial products accumulate in an f32 VMEM scratch (init/finalize pattern).
    k = pl.program_id(1)

    @pl.when(k == 0)
    def _():
        acc_ref[...] = jnp.zeros_like(acc_ref)

    x = x_ref[...]
    if x.dtype != w_ref.dtype:
        x = x.astype(w_ref.dtype)
    acc_ref[...] += jnp.dot(x, w_ref[...], preferred_element_type=jnp.float32)

    @pl.when(k == pl.num_programs(1) - 1)
    def _():
        y = acc_ref[...] + b_ref[...]
        q_ref[...] = y[:, :qk_dim].astype(q_ref.dtype)
        kv_ref[...] = y[:, qk_dim:].astype(kv_ref.dtype)


# ---------------------------------------------------------------------------
# Tile choosers
# ---------------------------------------------------------------------------
def _resident_footprint(tm, dim, out_dim, w_bytes, x_bytes, o_bytes):
    return (dim * out_dim * w_bytes        # fused weight slab, single-buffered
            + out_dim * 4                  # f32 bias, single-buffered
            + 2 * tm * dim * x_bytes       # streamed x tile, double-buffered
            + 2 * tm * out_dim * o_bytes   # streamed q+kv output tiles, double-buffered
            + tm * out_dim * 4)            # headroom for the f32 intermediate


def _choose_tm(n, dim, out_dim, w_bytes, x_bytes, o_bytes, tm_max, budget, row_align):
    tm = tm_max
    while tm > 128 and _resident_footprint(tm, dim, out_dim, w_bytes, x_bytes, o_bytes) > budget:
        tm //= 2
    if _resident_footprint(tm, dim, out_dim, w_bytes, x_bytes, o_bytes) > budget:
        return None                        # resident path does not fit -> K-tiled fallback
    # Never use a tile taller than the (alignment-rounded) row count.
    tm = min(tm, max(row_align, _round_up(n, row_align)))
    # v7x megacore: prefer >= 2 row tiles when there is enough work so both
    # TensorCores get a share of the "parallel" row grid.
    while n >= 256 and tm > 128 and _cdiv(n, tm) < 2:
        tm //= 2
    tm = max(row_align, (tm // row_align) * row_align)
    return tm


def _ktiled_footprint(tm, tk, out_dim, w_bytes, x_bytes, o_bytes):
    return (2 * tk * out_dim * w_bytes     # streamed weight K-slab, double-buffered
            + 2 * tm * tk * x_bytes        # streamed x tile
            + tm * out_dim * 4             # f32 accumulator scratch
            + 2 * tm * out_dim * o_bytes   # output tiles
            + out_dim * 4)                 # resident bias


def _choose_ktiled(n, dim, out_dim, w_bytes, x_bytes, o_bytes, budget, row_align, k_tile):
    if k_tile is not None:
        tk = k_tile if (dim % k_tile == 0 and k_tile % 128 == 0) else None
    else:
        tk = next((c for c in (1024, 512, 256, 128) if dim % c == 0), None)
    if tk is None:
        return None, None
    tm = 256
    while tm > row_align and _ktiled_footprint(tm, tk, out_dim, w_bytes, x_bytes, o_bytes) > budget:
        tm //= 2
    while tk > 128 and dim % (tk // 2) == 0 and \
            _ktiled_footprint(tm, tk, out_dim, w_bytes, x_bytes, o_bytes) > budget:
        tk //= 2
    tm = min(tm, max(row_align, _round_up(n, row_align)))
    tm = max(row_align, (tm // row_align) * row_align)
    return tm, tk


# ---------------------------------------------------------------------------
# Forward wrapper
# ---------------------------------------------------------------------------
def qkv_linear_pallas(x, params, *, out_dtype=None, tm=None,
                      vmem_tile_budget=None, vmem_limit_bytes=None,
                      force_k_tiled=False, k_tile=None):
    """x: (..., dim); params from prepare_qkv_params.

    Returns (q, kv) with q: (..., qk_dim), kv: (..., qk_dim + dim), matching
    PyTorch QKVLinear.forward.  x is read exactly once from HBM and q/kv are
    written exactly once (no wrapper-side pad / cast / slice passes).
    """
    w, b, qk_dim = params
    dim, out_dim = w.shape
    kv_dim = out_dim - qk_dim
    if x.shape[-1] != dim:
        raise ValueError(f"x last dim {x.shape[-1]} != weight dim {dim}")
    lead_shape = x.shape[:-1]
    if out_dtype is None:
        out_dtype = x.dtype

    x2 = x.reshape(-1, dim)        # free: only merges leading dims
    n = x2.shape[0]

    x_bytes = jnp.dtype(x2.dtype).itemsize
    w_bytes = jnp.dtype(w.dtype).itemsize
    o_bytes = jnp.dtype(out_dtype).itemsize
    # bf16 packs two rows per sublane: keep row tiles 16-aligned in that case.
    row_align = 16 if min(x_bytes, w_bytes, o_bytes) < 4 else 8

    default_budget, default_limit = _vmem_defaults()
    budget = default_budget if vmem_tile_budget is None else vmem_tile_budget
    limit = default_limit if vmem_limit_bytes is None else vmem_limit_bytes

    tm_max = tm if tm is not None else (1024 if budget > 64 * _MIB else 512)

    tm_eff = None
    if not force_k_tiled:
        tm_eff = _choose_tm(n, dim, out_dim, w_bytes, x_bytes, o_bytes,
                            tm_max, budget, row_align)

    out_shape = (jax.ShapeDtypeStruct((n, qk_dim), out_dtype),
                 jax.ShapeDtypeStruct((n, kv_dim), out_dtype))

    if tm_eff is not None:
        # Main path: fused weight slab resident in VMEM, row tiles streamed.
        grid = (_cdiv(n, tm_eff),)   # ragged N -> partial last block, masked writeback
        q2, kv2 = pl.pallas_call(
            functools.partial(_qkv_fused_kernel, qk_dim=qk_dim),
            out_shape=out_shape,
            grid_spec=pltpu.PrefetchScalarGridSpec(
                num_scalar_prefetch=0,
                grid=grid,
                in_specs=[
                    pl.BlockSpec((tm_eff, dim), lambda i: (i, 0)),
                    _resident_spec((dim, out_dim), lambda i: (0, 0)),
                    _resident_spec((1, out_dim), lambda i: (0, 0)),
                ],
                out_specs=(
                    pl.BlockSpec((tm_eff, qk_dim), lambda i: (i, 0)),
                    pl.BlockSpec((tm_eff, kv_dim), lambda i: (i, 0)),
                ),
            ),
            compiler_params=pltpu.CompilerParams(
                dimension_semantics=("parallel",),
                vmem_limit_bytes=limit,
            ),
        )(x2, w, b)
    else:
        # Fallback: weight slab does not fit the VMEM budget -> K-tiled accumulation.
        tm_k, tk = _choose_ktiled(n, dim, out_dim, w_bytes, x_bytes, o_bytes,
                                  budget, row_align, k_tile)
        if tm_k is None:
            # TODO(synk): add an output-column (N) tiled path for configs where no
            # 128-multiple K tile divides `dim` and the weight slab exceeds VMEM.
            raise ValueError(
                "QKVLinear weight slab does not fit the VMEM budget and dim is "
                f"not divisible by a 128-multiple K tile (dim={dim}).")
        grid = (_cdiv(n, tm_k), dim // tk)   # reduction axis last
        q2, kv2 = pl.pallas_call(
            functools.partial(_qkv_ktiled_kernel, qk_dim=qk_dim),
            out_shape=out_shape,
            grid_spec=pltpu.PrefetchScalarGridSpec(
                num_scalar_prefetch=0,
                grid=grid,
                in_specs=[
                    pl.BlockSpec((tm_k, tk), lambda i, k: (i, k)),
                    pl.BlockSpec((tk, out_dim), lambda i, k: (k, 0)),
                    _resident_spec((1, out_dim), lambda i, k: (0, 0)),
                ],
                out_specs=(
                    pl.BlockSpec((tm_k, qk_dim), lambda i, k: (i, 0)),
                    pl.BlockSpec((tm_k, kv_dim), lambda i, k: (i, 0)),
                ),
                scratch_shapes=[pltpu.VMEM((tm_k, out_dim), jnp.float32)],
            ),
            compiler_params=pltpu.CompilerParams(
                dimension_semantics=("parallel", "arbitrary"),
                vmem_limit_bytes=limit,
            ),
        )(x2, w, b)

    q = q2.reshape(*lead_shape, qk_dim)
    kv = kv2.reshape(*lead_shape, kv_dim)
    return q, kv


def reference_qkv_linear(x, weight, bias, qk_dim):
    y = jnp.einsum("...d,od->...o", x, weight)
    if bias is not None:
        y = y + bias
    return y[..., :qk_dim], y[..., qk_dim:]


if __name__ == "__main__":
    # Small deterministic config consistent with the module; dim/qk_dim are
    # 128-aligned so the fused-accumulator slices and both outputs stay lane-dense.
    B, H, W = 2, 16, 16
    dim, qk_dim = 256, 128
    out_dim = qk_dim + qk_dim + dim          # 512

    key = jax.random.PRNGKey(0)
    kx, kw, kb, kr = jax.random.split(key, 4)

    x = jax.random.normal(kx, (B, H, W, dim), dtype=jnp.float32)
    bound = 1.0 / (dim ** 0.5)               # nn.Linear default init range
    weight = jax.random.uniform(kw, (out_dim, dim), minval=-bound, maxval=bound,
                                dtype=jnp.float32)
    bias = jax.random.uniform(kb, (out_dim,), minval=-bound, maxval=bound,
                              dtype=jnp.float32)

    params = prepare_qkv_params(weight, bias, qk_dim)
    q_ref, kv_ref = reference_qkv_linear(x, weight, bias, qk_dim)

    # Tolerances are loose because TPU default matmul precision uses bf16 passes
    # for f32 inputs (both the kernel and the einsum reference).
    TOL = dict(atol=5e-2, rtol=5e-2)

    # 1) Main fused-resident path: n = 512 rows -> 2 row tiles (megacore-friendly).
    q, kv = qkv_linear_pallas(x, params)
    q, kv = jax.block_until_ready(q), jax.block_until_ready(kv)
    assert q.shape == (B, H, W, qk_dim)
    assert kv.shape == (B, H, W, qk_dim + dim)
    assert jnp.allclose(q, q_ref, **TOL)
    assert jnp.allclose(kv, kv_ref, **TOL)

    # 2) Ragged row count (n = 25): partial final block, no wrapper-side pad/slice.
    x_r = jax.random.normal(kr, (1, 5, 5, dim), dtype=jnp.float32)
    q_r, kv_r = qkv_linear_pallas(x_r, params)
    q_r, kv_r = jax.block_until_ready(q_r), jax.block_until_ready(kv_r)
    qr_ref, kvr_ref = reference_qkv_linear(x_r, weight, bias, qk_dim)
    assert jnp.allclose(q_r, qr_ref, **TOL)
    assert jnp.allclose(kv_r, kvr_ref, **TOL)

    # 3) bf16 weights + bf16 outputs: x stays f32 in HBM, cast happens in-kernel.
    params_bf16 = prepare_qkv_params(weight, bias, qk_dim, compute_dtype=jnp.bfloat16)
    q_b, kv_b = qkv_linear_pallas(x, params_bf16, out_dtype=jnp.bfloat16)
    q_b, kv_b = jax.block_until_ready(q_b), jax.block_until_ready(kv_b)
    assert q_b.dtype == jnp.bfloat16 and kv_b.dtype == jnp.bfloat16
    assert jnp.allclose(q_b.astype(jnp.float32), q_ref, atol=1e-1, rtol=1e-1)
    assert jnp.allclose(kv_b.astype(jnp.float32), kv_ref, atol=1e-1, rtol=1e-1)

    # 4) K-tiled fallback (used automatically when the weight slab exceeds the
    #    VMEM budget); forced here with a small K tile to exercise accumulation.
    q_k, kv_k = qkv_linear_pallas(x, params, force_k_tiled=True, k_tile=128)
    q_k, kv_k = jax.block_until_ready(q_k), jax.block_until_ready(kv_k)
    assert jnp.allclose(q_k, q_ref, **TOL)
    assert jnp.allclose(kv_k, kv_ref, **TOL)

    print("KERNEL_OK")
</pallas_src>

<mosaic_0001>
module attributes {stable_mosaic.version = 11 : i64} {
  func.func @_qkv_fused_kernel(%arg0: i32, %arg1: memref<256x256xf32, #tpu.memory_space<vmem>>, %arg2: memref<256x512xf32, #tpu.memory_space<vmem>>, %arg3: memref<1x512xf32, #tpu.memory_space<vmem>>, %arg4: memref<256x128xf32, #tpu.memory_space<vmem>>, %arg5: memref<256x384xf32, #tpu.memory_space<vmem>>) attributes {dimension_semantics = [#tpu.dimension_semantics<parallel>], iteration_bounds = array<i64: 2>, scalar_prefetch = 0 : i64, scratch_operands = 0 : i64, tpu.core_type = #tpu.core_type<tc>, window_params = [{transform_indices = @transform_0, window_bounds = array<i64: 256, 256>}, {pipeline_mode = #tpu.pipeline_mode<synchronous>, transform_indices = @transform_1, window_bounds = array<i64: 256, 512>}, {pipeline_mode = #tpu.pipeline_mode<synchronous>, transform_indices = @transform_2, window_bounds = array<i64: 1, 512>}, {transform_indices = @transform_3, window_bounds = array<i64: 256, 128>}, {transform_indices = @transform_4, window_bounds = array<i64: 256, 384>}]} {
    %c0 = arith.constant 0 : index
    %c0_0 = arith.constant 0 : index
    %0 = vector.load %arg1[%c0, %c0_0] : memref<256x256xf32, #tpu.memory_space<vmem>>, vector<256x256xf32>
    %c0_1 = arith.constant 0 : index
    %c0_2 = arith.constant 0 : index
    %1 = vector.load %arg2[%c0_1, %c0_2] : memref<256x512xf32, #tpu.memory_space<vmem>>, vector<256x512xf32>
    %cst = arith.constant dense<0.000000e+00> : vector<256x512xf32>
    %2 = tpu.matmul %0, %1, %cst {dimension_numbers = #tpu.dot_dimension_numbers<[1], [0], [0], [1], [0, 0, 1, 1], [], []>} : vector<256x256xf32>, vector<256x512xf32>, vector<256x512xf32> -> vector<256x512xf32>
    %c0_3 = arith.constant 0 : index
    %c0_4 = arith.constant 0 : index
    %3 = vector.load %arg3[%c0_3, %c0_4] : memref<1x512xf32, #tpu.memory_space<vmem>>, vector<1x512xf32>
    %4 = vector.broadcast %3 : vector<1x512xf32> to vector<256x512xf32>
    %5 = arith.addf %2, %4 : vector<256x512xf32>
    %6 = vector.extract_strided_slice %5 {offsets = [0, 0], sizes = [256, 128], strides = [1, 1]} : vector<256x512xf32> to vector<256x128xf32>
    %c0_5 = arith.constant 0 : index
    %c0_6 = arith.constant 0 : index
    %7 = vector.load %arg4[%c0_5, %c0_6] : memref<256x128xf32, #tpu.memory_space<vmem>>, vector<256x128xf32>
    tpu.vector_store %arg4[%c0_5, %c0_6], %6 {strides = array<i32>} : memref<256x128xf32, #tpu.memory_space<vmem>>, vector<256x128xf32>,
    %8 = vector.extract_strided_slice %5 {offsets = [0, 128], sizes = [256, 384], strides = [1, 1]} : vector<256x512xf32> to vector<256x384xf32>
    %c0_7 = arith.constant 0 : index
    %c0_8 = arith.constant 0 : index
    %9 = vector.load %arg5[%c0_7, %c0_8] : memref<256x384xf32, #tpu.memory_space<vmem>>, vector<256x384xf32>
    tpu.vector_store %arg5[%c0_7, %c0_8], %8 {strides = array<i32>} : memref<256x384xf32, #tpu.memory_space<vmem>>, vector<256x384xf32>,
    return
  }
  func.func @transform_0(%arg0: i32) -> (i32, i32) {
    %c0_i32 = arith.constant 0 : i32
    %c0_i32_0 = arith.constant 0 : i32
    return %arg0, %c0_i32 : i32, i32
  }
  func.func @transform_1(%arg0: i32) -> (i32, i32) {
    %c0_i32 = arith.constant 0 : i32
    %c0_i32_0 = arith.constant 0 : i32
    %c0_i32_1 = arith.constant 0 : i32
    return %c0_i32, %c0_i32_0 : i32, i32
  }
  func.func @transform_2(%arg0: i32) -> (i32, i32) {
    %c0_i32 = arith.constant 0 : i32
    %c0_i32_0 = arith.constant 0 : i32
    %c0_i32_1 = arith.constant 0 : i32
    return %c0_i32, %c0_i32_0 : i32, i32
  }
  func.func @transform_3(%arg0: i32) -> (i32, i32) {
    %c0_i32 = arith.constant 0 : i32
    %c0_i32_0 = arith.constant 0 : i32
    return %arg0, %c0_i32 : i32, i32
  }
  func.func @transform_4(%arg0: i32) -> (i32, i32) {
    %c0_i32 = arith.constant 0 : i32
    %c0_i32_0 = arith.constant 0 : i32
    return %arg0, %c0_i32 : i32, i32
  }
}

</mosaic_0001>

<llo_original>
// kernel: tpu_custom_call.1
$region0: #{tpu_custom_call.1}
  #allocation0 [shape = 'u32[]', space=smem, size = 0x4, offset = 0x4, fixed_abs, tag = 'smem constant byte address 0x4 - core index']
  #allocation1 [shape = 'u32[144,128]{1,0:T(1,128)}', space=vmem, size = 0x12000, scoped, tag = 'internal scratch']
  %s0 = inlined_call_operand.hbm [shape: f32[512,256], index: 0, kind: input, shape index: {}]
  %s1 = inlined_call_operand.hbm [shape: f32[256,512], index: 1, kind: input, shape index: {}]
  %s2 = inlined_call_operand.hbm [shape: f32[1,512], index: 2, kind: input, shape index: {}]
  %s3 = inlined_call_operand.hbm [shape: f32[512,128], index: 3, kind: output, shape index: {0}]
  %s4 = inlined_call_operand.hbm [shape: f32[512,384], index: 4, kind: output, shape index: {1}]
  %5 = xla_tuple %s3, %s4
  %s6 = sld [smem:[#allocation0]]
  $region65: #{tpu_custom_call.1} parent=0
    _
  %s8 = ssub.s32 1, %s6
  %s9 = scalar_select 0, %s8, %s6
  $region1: #{tpu_custom_call.1} parent=0
    #allocation2 [shape = 'u8[524288]{0}', space=vmem, size = 0x80000, scoped, tag = 'input window, operand 0']
    #allocation3 [shape = 's32[2]{0}', space=sflag, size = 0x8, scoped, tag = 'scoped memory for tpu_custom_call.1']
    #allocation4 [shape = 's32[2]{0}', space=sflag, size = 0x8, scoped, tag = 'scoped memory for tpu_custom_call.1']
    #allocation5 [shape = 'u8[524288]{0}', space=vmem, size = 0x80000, scoped, tag = 'input window, operand 1, single buffered']
    #allocation6 [shape = 's32[1]{0}', space=sflag, size = 0x4, scoped, tag = 'scoped memory for tpu_custom_call.1']
    #allocation7 [shape = 'u8[2048]{0}', space=vmem, size = 0x800, scoped, tag = 'input window, operand 2, single buffered']
    #allocation8 [shape = 'u8[262144]{0}', space=vmem, size = 0x40000, scoped, tag = 'output window, operand 0']
    #allocation9 [shape = 'u8[786432]{0}', space=vmem, size = 0xc0000, scoped, tag = 'output window, operand 1']
    #allocation10 [shape = 's32[2]{0}', space=sflag, size = 0x8, scoped, tag = 'scoped memory for tpu_custom_call.1']
    %10 = vsyncpa [#allocation3], 0
    %s11 = scalar_lea.sflag [#allocation3], 1
    %12 = vsyncpa %s11, 0
    %13 = vsyncpa [#allocation6], 0
    %14 = vsyncpa [#allocation4], 0
    %s15 = scalar_lea.sflag [#allocation4], 1
    %16 = vsyncpa %s15, 0
    %17 = vsyncpa [#allocation10], 0
    %s18 = scalar_lea.sflag [#allocation10], 1
    %19 = vsyncpa %s18, 0
    loop: start=0, step=1, limit=4
    $region2: #{tpu_custom_call.1} parent=1 // loop_pre_header
      _
    $region3: #{tpu_custom_call.1} parent=1 // loop_header
      %s21 = sphi 0, %s25
      %p22 = scmp.ge.s32.totalorder %s21, 4
      %s31 = sphi 0, %s33
      %s34 = sphi 0, %s31
      %s35 = sphi 0, %s34
      %s51 = sphi 0, %s35
      %s55 = sphi 0, %s55
      %s57 = sphi 0, %s55
      %s58 = sphi 0, %s57
      %s72 = sphi 0, %s58
      %s76 = sphi 0, %s76
      %s78 = sphi 0, %s76
      %s79 = sphi 0, %s78
      %s93 = sphi 0, %s79
      %s99 = sphi 0, %s101
      %s102 = sphi 0, %s99
      %s103 = sphi 0, %s102
      %s119 = sphi 0, %s103
      %s125 = sphi 0, %s127
      %s128 = sphi 0, %s125
      %s129 = sphi 0, %s128
      %s145 = sphi 0, %s129
    $region4: #{tpu_custom_call.1} parent=1 // loop_header_branch
      %24 = sbr.rel (%p22) target = $region8
    $region5: #{tpu_custom_call.1} parent=1 // loop_body
      %s26 = ssub.s32 %s21, 1
      %s27 = ssub.s32 %s21, 2
      %s28 = sadd.s32 %s21, 1
      %s29 = ssub.s32 %s21, %s28
      %p30 = scmp.eq.s32.totalorder %s29, 0
      %s32 = sadd.s32 %s31, 1
      %s33 = scalar_select %p30, %s31, %s32
      %p36 = pneg %p30
      %p37 = scmp.eq.s32.totalorder %s21, 1
      %p38 = por %p36, %p37
      %p39 = scmp.ne.s32.totalorder %s31, %s34
      %p40 = scmp.eq.s32.totalorder %s21, 0
      %p41 = por %p39, %p40
      %p42 = scmp.ne.s32.totalorder %s31, %s34
      %p43 = scmp.eq.s32.totalorder %s26, 1
      %p44 = por %p42, %p43
      %p45 = scmp.ne.s32.totalorder %s34, %s35
      %p46 = scmp.eq.s32.totalorder %s26, 0
      %p47 = por %p45, %p46
      %p48 = scmp.ne.s32.totalorder %s34, %s35
      %p49 = scmp.eq.s32.totalorder %s27, 1
      %p50 = por %p48, %p49
      %p52 = scmp.ne.s32.totalorder %s35, %s51
      %p53 = scmp.eq.s32.totalorder %s27, 0
      %p54 = por %p52, %p53
      %s56 = sadd.s32 %s55, 1
      %p59 = scmp.eq.s32.totalorder %s21, 1
      %p60 = scmp.ne.s32.totalorder %s55, %s57
      %p61 = scmp.eq.s32.totalorder %s21, 0
      %p62 = por %p60, %p61
      %p63 = scmp.ne.s32.totalorder %s55, %s57
      %p64 = scmp.eq.s32.totalorder %s26, 1
      %p65 = por %p63, %p64
      %p66 = scmp.ne.s32.totalorder %s57, %s58
      %p67 = scmp.eq.s32.totalorder %s26, 0
      %p68 = por %p66, %p67
      %p69 = scmp.ne.s32.totalorder %s57, %s58
      %p70 = scmp.eq.s32.totalorder %s27, 1
      %p71 = por %p69, %p70
      %p73 = scmp.ne.s32.totalorder %s58, %s72
      %p74 = scmp.eq.s32.totalorder %s27, 0
      %p75 = por %p73, %p74
      %s77 = sadd.s32 %s76, 1
      %p80 = scmp.eq.s32.totalorder %s21, 1
      %p81 = scmp.ne.s32.totalorder %s76, %s78
      %p82 = scmp.eq.s32.totalorder %s21, 0
      %p83 = por %p81, %p82
      %p84 = scmp.ne.s32.totalorder %s76, %s78
      %p85 = scmp.eq.s32.totalorder %s26, 1
      %p86 = por %p84, %p85
      %p87 = scmp.ne.s32.totalorder %s78, %s79
      %p88 = scmp.eq.s32.totalorder %s26, 0
      %p89 = por %p87, %p88
      %p90 = scmp.ne.s32.totalorder %s78, %s79
      %p91 = scmp.eq.s32.totalorder %s27, 1
      %p92 = por %p90, %p91
      %p94 = scmp.ne.s32.totalorder %s79, %s93
      %p95 = scmp.eq.s32.totalorder %s27, 0
      %p96 = por %p94, %p95
      %s97 = ssub.s32 %s21, %s28
      %p98 = scmp.eq.s32.totalorder %s97, 0
      %s100 = sadd.s32 %s99, 1
      %s101 = scalar_select %p98, %s99, %s100
      %p104 = pneg %p98
      %p105 = scmp.eq.s32.totalorder %s21, 1
      %p106 = por %p104, %p105
      %p107 = scmp.ne.s32.totalorder %s99, %s102
      %p108 = scmp.eq.s32.totalorder %s21, 0
      %p109 = por %p107, %p108
      %p110 = scmp.ne.s32.totalorder %s99, %s102
      %p111 = scmp.eq.s32.totalorder %s26, 1
      %p112 = por %p110, %p111
      %p113 = scmp.ne.s32.totalorder %s102, %s103
      %p114 = scmp.eq.s32.totalorder %s26, 0
      %p115 = por %p113, %p114
      %p116 = scmp.ne.s32.totalorder %s102, %s103
      %p117 = scmp.eq.s32.totalorder %s27, 1
      %p118 = por %p116, %p117
      %p120 = scmp.ne.s32.totalorder %s103, %s119
      %p121 = scmp.eq.s32.totalorder %s27, 0
      %p122 = por %p120, %p121
      %s123 = ssub.s32 %s21, %s28
      %p124 = scmp.eq.s32.totalorder %s123, 0
      %s126 = sadd.s32 %s125, 1
      %s127 = scalar_select %p124, %s125, %s126
      %p130 = pneg %p124
      %p131 = scmp.eq.s32.totalorder %s21, 1
      %p132 = por %p130, %p131
      %p133 = scmp.ne.s32.totalorder %s125, %s128
      %p134 = scmp.eq.s32.totalorder %s21, 0
      %p135 = por %p133, %p134
      %p136 = scmp.ne.s32.totalorder %s125, %s128
      %p137 = scmp.eq.s32.totalorder %s26, 1
      %p138 = por %p136, %p137
      %p139 = scmp.ne.s32.totalorder %s128, %s129
      %p140 = scmp.eq.s32.totalorder %s26, 0
      %p141 = por %p139, %p140
      %p142 = scmp.ne.s32.totalorder %s128, %s129
      %p143 = scmp.eq.s32.totalorder %s27, 1
      %p144 = por %p142, %p143
      %p146 = scmp.ne.s32.totalorder %s129, %s145
      %p147 = scmp.eq.s32.totalorder %s27, 0
      %p148 = por %p146, %p147
      %p149 = scmp.le.s32.totalorder 1, %s21
      %p150 = scmp.lt.s32.totalorder %s21, 3
      %p151 = pnand %p149, %p150
      %p152 = pneg %p151
      // Predicated region
      $region9: #{tpu_custom_call.1} parent=5 // pred_check
        _
      $region10: #{tpu_custom_call.1} parent=5 // pred_check_branch
        %154 = sbr.rel (%p151) target = $region12
      $region11: #{tpu_custom_call.1} parent=5 // pred_region
        %s155 = ssub.s32 %s21, 1
        // Predicated region
        $region13: #{tpu_custom_call.1} parent=11 // pred_check
          %p156 = pneg %p68
        $region14: #{tpu_custom_call.1} parent=11 // pred_check_branch
          %158 = sbr.rel (%p156) target = $region16
        $region15: #{tpu_custom_call.1} parent=11 // pred_region
          %s160 = ssub.s32 16384, 16384
          %161 = vsyncadd [#allocation6], %s160
          %s162 = sshll.u32 [#allocation5], 4
          %s163 = int_to_ptr.vmem [resolvable:$true] %s162
          %168 = dma.hbm_to_vmem [thread:$0]  %s1, 16384, %s163, [#allocation6], 512, 512, 32
        $region16: #{tpu_custom_call.1} parent=11 // pred_fallthru
          _
        // Predicated region
        $region17: #{tpu_custom_call.1} parent=11 // pred_check
          %p169 = pneg %p89
        $region18: #{tpu_custom_call.1} parent=11 // pred_check_branch
          %171 = sbr.rel (%p169) target = $region20
        $region19: #{tpu_custom_call.1} parent=11 // pred_region
          %s173 = ssub.s32 64, 64
          %174 = vsyncadd [#allocation6], %s173
          %s176 = sshll.u32 [#allocation7], 4
          %s177 = int_to_ptr.vmem [resolvable:$true] %s176
          %179 = dma.hbm_to_vmem [thread:$0]  %s2, 64, %s177, [#allocation6]
        $region20: #{tpu_custom_call.1} parent=11 // pred_fallthru
          _
      $region12: #{tpu_custom_call.1} parent=5 // pred_fallthru
        _
      %p180 = scmp.lt.s32.totalorder %s21, 2
      // Predicated region
      $region21: #{tpu_custom_call.1} parent=5 // pred_check
        %p181 = pneg %p180
      $region22: #{tpu_custom_call.1} parent=5 // pred_check_branch
        %183 = sbr.rel (%p181) target = $region24
      $region23: #{tpu_custom_call.1} parent=5 // pred_region
        // Predicated region
        $region25: #{tpu_custom_call.1} parent=23 // pred_check
          %p184 = pneg %p41
        $region26: #{tpu_custom_call.1} parent=23 // pred_check_branch
          %186 = sbr.rel (%p184) target = $region28
        $region27: #{tpu_custom_call.1} parent=23 // pred_region
          %s187 = sand.u32 %s31, 1
          %s188 = scalar_lea.sflag [#allocation3], %s187
          %s189 = sand.u32 %s31, 1
          %s190 = smul.addr %s189, 512
          %s191 = scalar_lea.vmem [#allocation2], %s190
          %s192 = smul.u32 32, %s21
          %s194 = ssub.s32 8192, 8192
          %195 = vsyncadd %s188, %s194
          %s196 = smul.addr %s192, 2
          %s197 = smul.addr %s196, 128
          %s198 = scalar_lea.hbm %s0, %s197
          %s199 = sshll.u32 %s191, 4
          %s200 = int_to_ptr.vmem [resolvable:$true] %s199
          %205 = dma.hbm_to_vmem [thread:$0]  %s198, 8192, %s200, %s188, 256, 256, 16
        $region28: #{tpu_custom_call.1} parent=23 // pred_fallthru
          _
      $region24: #{tpu_custom_call.1} parent=5 // pred_fallthru
        _
      %p206 = scmp.le.s32.totalorder 1, %s21
      %p207 = scmp.lt.s32.totalorder %s21, 3
      %p208 = pnand %p206, %p207
      %p209 = pneg %p208
      // Predicated region
      $region29: #{tpu_custom_call.1} parent=5 // pred_check
        _
      $region30: #{tpu_custom_call.1} parent=5 // pred_check_branch
        %211 = sbr.rel (%p208) target = $region32
      $region31: #{tpu_custom_call.1} parent=5 // pred_region
        %s212 = ssub.s32 %s21, 1
        %s213 = sand.u32 %s34, 1
        %s214 = scalar_lea.sflag [#allocation3], %s213
        %s215 = sand.u32 %s34, 1
        %s216 = smul.addr %s215, 512
        %s217 = scalar_lea.vmem [#allocation2], %s216
        // Predicated region
        $region33: #{tpu_custom_call.1} parent=31 // pred_check
          %p218 = pneg %p47
        $region34: #{tpu_custom_call.1} parent=31 // pred_check_branch
          %220 = sbr.rel (%p218) target = $region36
        $region35: #{tpu_custom_call.1} parent=31 // pred_region
          %221 = dma.done %s214, 8192
        $region36: #{tpu_custom_call.1} parent=31 // pred_fallthru
          _
        // Predicated region
        $region37: #{tpu_custom_call.1} parent=31 // pred_check
          %p222 = pneg %p68
        $region38: #{tpu_custom_call.1} parent=31 // pred_check_branch
          %224 = sbr.rel (%p222) target = $region40
        $region39: #{tpu_custom_call.1} parent=31 // pred_region
          %225 = dma.done [#allocation6], 16384
        $region40: #{tpu_custom_call.1} parent=31 // pred_fallthru
          _
        // Predicated region
        $region41: #{tpu_custom_call.1} parent=31 // pred_check
          %p226 = pneg %p89
        $region42: #{tpu_custom_call.1} parent=31 // pred_check_branch
          %228 = sbr.rel (%p226) target = $region44
        $region43: #{tpu_custom_call.1} parent=31 // pred_region
          %229 = dma.done [#allocation6], 64
        $region44: #{tpu_custom_call.1} parent=31 // pred_fallthru
          _
        %s230 = sand.u32 %s34, 1
        %s231 = scalar_lea.sflag [#allocation3], %s230
        %s232 = sand.u32 %s34, 1
        %s233 = smul.addr %s232, 512
        %s234 = scalar_lea.vmem [#allocation2], %s233
        %p235 = pneg %p47
        %p236 = pneg %p44
        %p237 = pneg %p68
        %p238 = pneg %p65
        %p239 = pneg %p89
        %p240 = pneg %p86
        %p241 = pneg %p115
        %p242 = pneg %p112
        %s243 = sand.u32 %s102, 1
        %s244 = scalar_lea.sflag [#allocation4], %s243
        %s245 = sand.u32 %s102, 1
        %s246 = smul.addr %s245, 256
        %s247 = scalar_lea.vmem [#allocation8], %s246
        %p248 = pneg %p141
        %p249 = pneg %p138
        %s250 = sand.u32 %s128, 1
        %s251 = scalar_lea.sflag [#allocation10], %s250
        %s252 = sand.u32 %s128, 1
        %s253 = smul.addr %s252, 768
        %s254 = scalar_lea.vmem [#allocation9], %s253
        %s255 = smul.u32 32, %s26
        %s256 = smul.u32 32, %s26
        %s257 = smul.u32 32, %s26
        %v258 = vld [vmem:[%s217] sm:$0xff]
        %v259 = vld [vmem:[%s217 + $0x8] sm:$0xff]
        %v260 = vld [vmem:[%s217 + $0x10] sm:$0xff]
        %v261 = vld [vmem:[%s217 + $0x18] sm:$0xff]
        %v262 = vld [vmem:[%s217 + $0x20] sm:$0xff]
        %v263 = vld [vmem:[%s217 + $0x28] sm:$0xff]
        %v264 = vld [vmem:[%s217 + $0x30] sm:$0xff]
        %v265 = vld [vmem:[%s217 + $0x38] sm:$0xff]
        %v266 = vld [vmem:[%s217 + $0x40] sm:$0xff]
        %v267 = vld [vmem:[%s217 + $0x48] sm:$0xff]
        %v268 = vld [vmem:[%s217 + $0x50] sm:$0xff]
        %v269 = vld [vmem:[%s217 + $0x58] sm:$0xff]
        %v270 = vld [vmem:[%s217 + $0x60] sm:$0xff]
        %v271 = vld [vmem:[%s217 + $0x68] sm:$0xff]
        %v272 = vld [vmem:[%s217 + $0x70] sm:$0xff]
        %v273 = vld [vmem:[%s217 + $0x78] sm:$0xff]
        %v274 = vld [vmem:[%s217 + $0x80] sm:$0xff]
        %v275 = vld [vmem:[%s217 + $0x88] sm:$0xff]
        %v276 = vld [vmem:[%s217 + $0x90] sm:$0xff]
        %v277 = vld [vmem:[%s217 + $0x98] sm:$0xff]
        %v278 = vld [vmem:[%s217 + $0xa0] sm:$0xff]
        %v279 = vld [vmem:[%s217 + $0xa8] sm:$0xff]
        %v280 = vld [vmem:[%s217 + $0xb0] sm:$0xff]
        %v281 = vld [vmem:[%s217 + $0xb8] sm:$0xff]
        %v282 = vld [vmem:[%s217 + $0xc0] sm:$0xff]
        %v283 = vld [vmem:[%s217 + $0xc8] sm:$0xff]
        %v284 = vld [vmem:[%s217 + $0xd0] sm:$0xff]
        %v285 = vld [vmem:[%s217 + $0xd8] sm:$0xff]
        %v286 = vld [vmem:[%s217 + $0xe0] sm:$0xff]
        %v287 = vld [vmem:[%s217 + $0xe8] sm:$0xff]
        %v288 = vld [vmem:[%s217 + $0xf0] sm:$0xff]
        %v289 = vld [vmem:[%s217 + $0xf8] sm:$0xff]
        %v290 = vld [vmem:[%s217 + $0x100] sm:$0xff]
        %v291 = vld [vmem:[%s217 + $0x108] sm:$0xff]
        %v292 = vld [vmem:[%s217 + $0x110] sm:$0xff]
        %v293 = vld [vmem:[%s217 + $0x118] sm:$0xff]
        %v294 = vld [vmem:[%s217 + $0x120] sm:$0xff]
        %v295 = vld [vmem:[%s217 + $0x128] sm:$0xff]
        %v296 = vld [vmem:[%s217 + $0x130] sm:$0xff]
        %v297 = vld [vmem:[%s217 + $0x138] sm:$0xff]
        %v298 = vld [vmem:[%s217 + $0x140] sm:$0xff]
        %v299 = vld [vmem:[%s217 + $0x148] sm:$0xff]
        %v300 = vld [vmem:[%s217 + $0x150] sm:$0xff]
        %v301 = vld [vmem:[%s217 + $0x158] sm:$0xff]
        %v302 = vld [vmem:[%s217 + $0x160] sm:$0xff]
        %v303 = vld [vmem:[%s217 + $0x168] sm:$0xff]
        %v304 = vld [vmem:[%s217 + $0x170] sm:$0xff]
        %v305 = vld [vmem:[%s217 + $0x178] sm:$0xff]
        %v306 = vld [vmem:[%s217 + $0x180] sm:$0xff]
        %v307 = vld [vmem:[%s217 + $0x188] sm:$0xff]
        %v308 = vld [vmem:[%s217 + $0x190] sm:$0xff]
        %v309 = vld [vmem:[%s217 + $0x198] sm:$0xff]
        %v310 = vld [vmem:[%s217 + $0x1a0] sm:$0xff]
        %v311 = vld [vmem:[%s217 + $0x1a8] sm:$0xff]
        %v312 = vld [vmem:[%s217 + $0x1b0] sm:$0xff]
        %v313 = vld [vmem:[%s217 + $0x1b8] sm:$0xff]
        %v314 = vld [vmem:[%s217 + $0x1c0] sm:$0xff]
        %v315 = vld [vmem:[%s217 + $0x1c8] sm:$0xff]
        %v316 = vld [vmem:[%s217 + $0x1d0] sm:$0xff]
        %v317 = vld [vmem:[%s217 + $0x1d8] sm:$0xff]
        %v318 = vld [vmem:[%s217 + $0x1e0] sm:$0xff]
        %v319 = vld [vmem:[%s217 + $0x1e8] sm:$0xff]
        %v320 = vld [vmem:[%s217 + $0x1f0] sm:$0xff]
        %v321 = vld [vmem:[%s217 + $0x1f8] sm:$0xff]
        %v322 = vld [vmem:[#allocation5] sm:$0xff]
        %v323 = vld [vmem:[#allocation5 + $0x8] sm:$0xff]
        %v324 = vld [vmem:[#allocation5 + $0x10] sm:$0xff]
        %v325 = vld [vmem:[#allocation5 + $0x18] sm:$0xff]
        %v326 = vld [vmem:[#allocation5 + $0x20] sm:$0xff]
        %v327 = vld [vmem:[#allocation5 + $0x28] sm:$0xff]
        %v328 = vld [vmem:[#allocation5 + $0x30] sm:$0xff]
        %v329 = vld [vmem:[#allocation5 + $0x38] sm:$0xff]
        %v330 = vld [vmem:[#allocation5 + $0x40] sm:$0xff]
        %v331 = vld [vmem:[#allocation5 + $0x48] sm:$0xff]
        %v332 = vld [vmem:[#allocation5 + $0x50] sm:$0xff]
        %v333 = vld [vmem:[#allocation5 + $0x58] sm:$0xff]
        %v334 = vld [vmem:[#allocation5 + $0x60] sm:$0xff]
        %v335 = vld [vmem:[#allocation5 + $0x68] sm:$0xff]
        %v336 = vld [vmem:[#allocation5 + $0x70] sm:$0xff]
        %v337 = vld [vmem:[#allocation5 + $0x78] sm:$0xff]
        %v338 = vld [vmem:[#allocation5 + $0x80] sm:$0xff]
        %v339 = vld [vmem:[#allocation5 + $0x88] sm:$0xff]
        %v340 = vld [vmem:[#allocation5 + $0x90] sm:$0xff]
        %v341 = vld [vmem:[#allocation5 + $0x98] sm:$0xff]
        %v342 = vld [vmem:[#allocation5 + $0xa0] sm:$0xff]
        %v343 = vld [vmem:[#allocation5 + $0xa8] sm:$0xff]
        %v344 = vld [vmem:[#allocation5 + $0xb0] sm:$0xff]
        %v345 = vld [vmem:[#allocation5 + $0xb8] sm:$0xff]
        %v346 = vld [vmem:[#allocation5 + $0xc0] sm:$0xff]
        %v347 = vld [vmem:[#allocation5 + $0xc8] sm:$0xff]
        %v348 = vld [vmem:[#allocation5 + $0xd0] sm:$0xff]
        %v349 = vld [vmem:[#allocation5 + $0xd8] sm:$0xff]
        %v350 = vld [vmem:[#allocation5 + $0xe0] sm:$0xff]
        %v351 = vld [vmem:[#allocation5 + $0xe8] sm:$0xff]
        %v352 = vld [vmem:[#allocation5 + $0xf0] sm:$0xff]
        %v353 = vld [vmem:[#allocation5 + $0xf8] sm:$0xff]
        %v354 = vld [vmem:[#allocation5 + $0x100] sm:$0xff]
        %v355 = vld [vmem:[#allocation5 + $0x108] sm:$0xff]
        %v356 = vld [vmem:[#allocation5 + $0x110] sm:$0xff]
        %v357 = vld [vmem:[#allocation5 + $0x118] sm:$0xff]
        %v358 = vld [vmem:[#allocation5 + $0x120] sm:$0xff]
        %v359 = vld [vmem:[#allocation5 + $0x128] sm:$0xff]
        %v360 = vld [vmem:[#allocation5 + $0x130] sm:$0xff]
        %v361 = vld [vmem:[#allocation5 + $0x138] sm:$0xff]
        %v362 = vld [vmem:[#allocation5 + $0x140] sm:$0xff]
        %v363 = vld [vmem:[#allocation5 + $0x148] sm:$0xff]
        %v364 = vld [vmem:[#allocation5 + $0x150] sm:$0xff]
        %v365 = vld [vmem:[#allocation5 + $0x158] sm:$0xff]
        %v366 = vld [vmem:[#allocation5 + $0x160] sm:$0xff]
        %v367 = vld [vmem:[#allocation5 + $0x168] sm:$0xff]
        %v368 = vld [vmem:[#allocation5 + $0x170] sm:$0xff]
        %v369 = vld [vmem:[#allocation5 + $0x178] sm:$0xff]
        %v370 = vld [vmem:[#allocation5 + $0x180] sm:$0xff]
        %v371 = vld [vmem:[#allocation5 + $0x188] sm:$0xff]
        %v372 = vld [vmem:[#allocation5 + $0x190] sm:$0xff]
        %v373 = vld [vmem:[#allocation5 + $0x198] sm:$0xff]
        %v374 = vld [vmem:[#allocation5 + $0x1a0] sm:$0xff]
        %v375 = vld [vmem:[#allocation5 + $0x1a8] sm:$0xff]
        %v376 = vld [vmem:[#allocation5 + $0x1b0] sm:$0xff]
        %v377 = vld [vmem:[#allocation5 + $0x1b8] sm:$0xff]
        %v378 = vld [vmem:[#allocation5 + $0x1c0] sm:$0xff]
        %v379 = vld [vmem:[#allocation5 + $0x1c8] sm:$0xff]
        %v380 = vld [vmem:[#allocation5 + $0x1d0] sm:$0xff]
        %v381 = vld [vmem:[#allocation5 + $0x1d8] sm:$0xff]
        %v382 = vld [vmem:[#allocation5 + $0x1e0] sm:$0xff]
        %v383 = vld [vmem:[#allocation5 + $0x1e8] sm:$0xff]
        %v384 = vld [vmem:[#allocation5 + $0x1f0] sm:$0xff]
        %v385 = vld [vmem:[#allocation5 + $0x1f8] sm:$0xff]
        %v386 = vld [vmem:[#allocation5 + $0x200] sm:$0xff]
        %v387 = vld [vmem:[#allocation5 + $0x208] sm:$0xff]
        %v388 = vld [vmem:[#allocation5 + $0x210] sm:$0xff]
        %v389 = vld [vmem:[#allocation5 + $0x218] sm:$0xff]
        %v390 = vld [vmem:[#allocation5 + $0x220] sm:$0xff]
        %v391 = vld [vmem:[#allocation5 + $0x228] sm:$0xff]
        %v392 = vld [vmem:[#allocation5 + $0x230] sm:$0xff]
        %v393 = vld [vmem:[#allocation5 + $0x238] sm:$0xff]
        %v394 = vld [vmem:[#allocation5 + $0x240] sm:$0xff]
        %v395 = vld [vmem:[#allocation5 + $0x248] sm:$0xff]
        %v396 = vld [vmem:[#allocation5 + $0x250] sm:$0xff]
        %v397 = vld [vmem:[#allocation5 + $0x258] sm:$0xff]
        %v398 = vld [vmem:[#allocation5 + $0x260] sm:$0xff]
        %v399 = vld [vmem:[#allocation5 + $0x268] sm:$0xff]
        %v400 = vld [vmem:[#allocation5 + $0x270] sm:$0xff]
        %v401 = vld [vmem:[#allocation5 + $0x278] sm:$0xff]
        %v402 = vld [vmem:[#allocation5 + $0x280] sm:$0xff]
        %v403 = vld [vmem:[#allocation5 + $0x288] sm:$0xff]
        %v404 = vld [vmem:[#allocation5 + $0x290] sm:$0xff]
        %v405 = vld [vmem:[#allocation5 + $0x298] sm:$0xff]
        %v406 = vld [vmem:[#allocation5 + $0x2a0] sm:$0xff]
        %v407 = vld [vmem:[#allocation5 + $0x2a8] sm:$0xff]
        %v408 = vld [vmem:[#allocation5 + $0x2b0] sm:$0xff]
        %v409 = vld [vmem:[#allocation5 + $0x2b8] sm:$0xff]
        %v410 = vld [vmem:[#allocation5 + $0x2c0] sm:$0xff]
        %v411 = vld [vmem:[#allocation5 + $0x2c8] sm:$0xff]
        %v412 = vld [vmem:[#allocation5 + $0x2d0] sm:$0xff]
        %v413 = vld [vmem:[#allocation5 + $0x2d8] sm:$0xff]
        %v414 = vld [vmem:[#allocation5 + $0x2e0] sm:$0xff]
        %v415 = vld [vmem:[#allocation5 + $0x2e8] sm:$0xff]
        %v416 = vld [vmem:[#allocation5 + $0x2f0] sm:$0xff]
        %v417 = vld [vmem:[#allocation5 + $0x2f8] sm:$0xff]
        %v418 = vld [vmem:[#allocation5 + $0x300] sm:$0xff]
        %v419 = vld [vmem:[#allocation5 + $0x308] sm:$0xff]
        %v420 = vld [vmem:[#allocation5 + $0x310] sm:$0xff]
        %v421 = vld [vmem:[#allocation5 + $0x318] sm:$0xff]
        %v422 = vld [vmem:[#allocation5 + $0x320] sm:$0xff]
        %v423 = vld [vmem:[#allocation5 + $0x328] sm:$0xff]
        %v424 = vld [vmem:[#allocation5 + $0x330] sm:$0xff]
        %v425 = vld [vmem:[#allocation5 + $0x338] sm:$0xff]
        %v426 = vld [vmem:[#allocation5 + $0x340] sm:$0xff]
        %v427 = vld [vmem:[#allocation5 + $0x348] sm:$0xff]
        %v428 = vld [vmem:[#allocation5 + $0x350] sm:$0xff]
        %v429 = vld [vmem:[#allocation5 + $0x358] sm:$0xff]
        %v430 = vld [vmem:[#allocation5 + $0x360] sm:$0xff]
        %v431 = vld [vmem:[#allocation5 + $0x368] sm:$0xff]
        %v432 = vld [vmem:[#allocation5 + $0x370] sm:$0xff]
        %v433 = vld [vmem:[#allocation5 + $0x378] sm:$0xff]
        %v434 = vld [vmem:[#allocation5 + $0x380] sm:$0xff]
        %v435 = vld [vmem:[#allocation5 + $0x388] sm:$0xff]
        %v436 = vld [vmem:[#allocation5 + $0x390] sm:$0xff]
        %v437 = vld [vmem:[#allocation5 + $0x398] sm:$0xff]
        %v438 = vld [vmem:[#allocation5 + $0x3a0] sm:$0xff]
        %v439 = vld [vmem:[#allocation5 + $0x3a8] sm:$0xff]
        %v440 = vld [vmem:[#allocation5 + $0x3b0] sm:$0xff]
        %v441 = vld [vmem:[#allocation5 + $0x3b8] sm:$0xff]
        %v442 = vld [vmem:[#allocation5 + $0x3c0] sm:$0xff]
        %v443 = vld [vmem:[#allocation5 + $0x3c8] sm:$0xff]
        %v444 = vld [vmem:[#allocation5 + $0x3d0] sm:$0xff]
        %v445 = vld [vmem:[#allocation5 + $0x3d8] sm:$0xff]
        %v446 = vld [vmem:[#allocation5 + $0x3e0] sm:$0xff]
        %v447 = vld [vmem:[#allocation5 + $0x3e8] sm:$0xff]
        %v448 = vld [vmem:[#allocation5 + $0x3f0] sm:$0xff]
        %v449 = vld [vmem:[#allocation5 + $0x3f8] sm:$0xff]
        %v450 = vld [vmem:[#allocation7] sm:$0xf]
        %v452 = vlaneseq
        %v453 = vshrl.u32 %v452, 7
        %v454 = vsub.s32 0, %v453
        %v455 = vrot.slane %v450, %v454
        %v456 = vlaneseq
        %v457 = vshrl.u32 %v456, 7
        %v458 = vsub.s32 1, %v457
        %v459 = vrot.slane %v450, %v458
        %v460 = vlaneseq
        %v461 = vshrl.u32 %v460, 7
        %v462 = vsub.s32 2, %v461
        %v463 = vrot.slane %v450, %v462
        %v464 = vlaneseq
        %v465 = vshrl.u32 %v464, 7
        %v466 = vsub.s32 3, %v465
        %v467 = vrot.slane %v450, %v466
        %472 = vmatprep.subr.mxu0 %v383
        %473 = vmatpush1.msra.mxu0 %v382
        %474 = vmatprep.subr.mxu0 %v379
        %475 = vmatpush1.msra.mxu0 %v378
        %476 = vmatprep.subr.mxu0 %v375
        %477 = vmatpush1.msra.mxu0 %v374
        %478 = vmatprep.subr.mxu0 %v371
        %479 = vmatpush1.msra.mxu0 %v370
        %480 = vmatprep.subr.mxu0 %v367
        %481 = vmatpush1.msra.mxu0 %v366
        %482 = vmatprep.subr.mxu0 %v363
        %483 = vmatpush1.msra.mxu0 %v362
        %484 = vmatprep.subr.mxu0 %v359
        %485 = vmatpush1.msra.mxu0 %v358
        %486 = vmatprep.subr.mxu0 %v355
        %487 = vmatpush1.msra.mxu0 %v354
        %488 = vmatprep.subr.mxu0 %v351
        %489 = vmatpush1.msra.mxu0 %v350
        %490 = vmatprep.subr.mxu0 %v347
        %491 = vmatpush1.msra.mxu0 %v346
        %492 = vmatprep.subr.mxu0 %v343
        %493 = vmatpush1.msra.mxu0 %v342
        %494 = vmatprep.subr.mxu0 %v339
        %495 = vmatpush1.msra.mxu0 %v338
        %496 = vmatprep.subr.mxu0 %v335
        %497 = vmatpush1.msra.mxu0 %v334
        %498 = vmatprep.subr.mxu0 %v331
        %499 = vmatpush1.msra.mxu0 %v330
        %500 = vmatprep.subr.mxu0 %v327
        %501 = vmatpush1.msra.mxu0 %v326
        %502 = vmatprep.subr.mxu0 %v323
        %503 = vmatpush1.msra.mxu0 %v322
        %504 = vmatprep.subr.mxu0 %v447
        %505 = vmatpush2.msra.mxu0 %v446
        %506 = vmatprep.subr.mxu0 %v443
        %507 = vmatpush2.msra.mxu0 %v442
        %508 = vmatprep.subr.mxu0 %v439
        %509 = vmatpush2.msra.mxu0 %v438
        %510 = vmatprep.subr.mxu0 %v435
        %511 = vmatpush2.msra.mxu0 %v434
        %512 = vmatprep.subr.mxu0 %v431
        %513 = vmatpush2.msra.mxu0 %v430
        %514 = vmatprep.subr.mxu0 %v427
        %515 = vmatpush2.msra.mxu0 %v426
        %516 = vmatprep.subr.mxu0 %v423
        %517 = vmatpush2.msra.mxu0 %v422
        %518 = vmatprep.subr.mxu0 %v419
        %519 = vmatpush2.msra.mxu0 %v418
        %520 = vmatprep.subr.mxu0 %v415
        %521 = vmatpush2.msra.mxu0 %v414
        %522 = vmatprep.subr.mxu0 %v411
        %523 = vmatpush2.msra.mxu0 %v410
        %524 = vmatprep.subr.mxu0 %v407
        %525 = vmatpush2.msra.mxu0 %v406
        %526 = vmatprep.subr.mxu0 %v403
        %527 = vmatpush2.msra.mxu0 %v402
        %528 = vmatprep.subr.mxu0 %v399
        %529 = vmatpush2.msra.mxu0 %v398
        %530 = vmatprep.subr.mxu0 %v395
        %531 = vmatpush2.msra.mxu0 %v394
        %532 = vmatprep.subr.mxu0 %v391
        %533 = vmatpush2.msra.mxu0 %v390
        %534 = vmatprep.subr.mxu0 %v387
        %535 = vmatpush2.msra.mxu0 %v386
        %536 = vmatprep.mubr.f32.mxu0 %v259
        %537 = vmatmul.mubr.f32.gmra.mxu0 %v258
        %v538 = vpop.f32.mrf.mxu0
        %v539 = vadd.f32 %v455, %v538
        %v540 = vpop.f32.mrf.mxu0
        %v541 = vadd.f32 %v459, %v540
        %542 = vmatprep.mubr.f32.mxu0 %v261
        %543 = vmatmul.mubr.f32.gmra.mxu0 %v260
        %v544 = vpop.f32.mrf.mxu0
        %v545 = vadd.f32 %v455, %v544
        %v546 = vpop.f32.mrf.mxu0
        %v547 = vadd.f32 %v459, %v546
        %548 = vmatprep.mubr.f32.mxu0 %v263
        %549 = vmatmul.mubr.f32.gmra.mxu0 %v262
        %v550 = vpop.f32.mrf.mxu0
        %v551 = vadd.f32 %v455, %v550
        %v552 = vpop.f32.mrf.mxu0
        %v553 = vadd.f32 %v459, %v552
        %554 = vmatprep.mubr.f32.mxu0 %v265
        %555 = vmatmul.mubr.f32.gmra.mxu0 %v264
        %v556 = vpop.f32.mrf.mxu0
        %v557 = vadd.f32 %v455, %v556
        %v558 = vpop.f32.mrf.mxu0
        %v559 = vadd.f32 %v459, %v558
        %560 = vmatprep.mubr.f32.mxu0 %v267
        %561 = vmatmul.mubr.f32.gmra.mxu0 %v266
        %v562 = vpop.f32.mrf.mxu0
        %v563 = vadd.f32 %v455, %v562
        %v564 = vpop.f32.mrf.mxu0
        %v565 = vadd.f32 %v459, %v564
        %566 = vmatprep.mubr.f32.mxu0 %v269
        %567 = vmatmul.mubr.f32.gmra.mxu0 %v268
        %v568 = vpop.f32.mrf.mxu0
        %v569 = vadd.f32 %v455, %v568
        %v570 = vpop.f32.mrf.mxu0
        %v571 = vadd.f32 %v459, %v570
        %572 = vmatprep.mubr.f32.mxu0 %v271
        %573 = vmatmul.mubr.f32.gmra.mxu0 %v270
        %v574 = vpop.f32.mrf.mxu0
        %v575 = vadd.f32 %v455, %v574
        %v576 = vpop.f32.mrf.mxu0
        %v577 = vadd.f32 %v459, %v576
        %578 = vmatprep.mubr.f32.mxu0 %v273
        %579 = vmatmul.mubr.f32.gmra.mxu0 %v272
        %v580 = vpop.f32.mrf.mxu0
        %v581 = vadd.f32 %v455, %v580
        %v582 = vpop.f32.mrf.mxu0
        %v583 = vadd.f32 %v459, %v582
        %584 = vmatprep.mubr.f32.mxu0 %v275
        %585 = vmatmul.mubr.f32.gmra.mxu0 %v274
        %v586 = vpop.f32.mrf.mxu0
        %v587 = vadd.f32 %v455, %v586
        %v588 = vpop.f32.mrf.mxu0
        %v589 = vadd.f32 %v459, %v588
        %590 = vmatprep.mubr.f32.mxu0 %v277
        %591 = vmatmul.mubr.f32.gmra.mxu0 %v276
        %v592 = vpop.f32.mrf.mxu0
        %v593 = vadd.f32 %v455, %v592
        %v594 = vpop.f32.mrf.mxu0
        %v595 = vadd.f32 %v459, %v594
        %596 = vmatprep.mubr.f32.mxu0 %v279
        %597 = vmatmul.mubr.f32.gmra.mxu0 %v278
        %v598 = vpop.f32.mrf.mxu0
        %v599 = vadd.f32 %v455, %v598
        %v600 = vpop.f32.mrf.mxu0
        %v601 = vadd.f32 %v459, %v600
        %602 = vmatprep.mubr.f32.mxu0 %v281
        %603 = vmatmul.mubr.f32.gmra.mxu0 %v280
        %v604 = vpop.f32.mrf.mxu0
        %v605 = vadd.f32 %v455, %v604
        %v606 = vpop.f32.mrf.mxu0
        %v607 = vadd.f32 %v459, %v606
        %608 = vmatprep.mubr.f32.mxu0 %v283
        %609 = vmatmul.mubr.f32.gmra.mxu0 %v282
        %v610 = vpop.f32.mrf.mxu0
        %v611 = vadd.f32 %v455, %v610
        %v612 = vpop.f32.mrf.mxu0
        %v613 = vadd.f32 %v459, %v612
        %614 = vmatprep.mubr.f32.mxu0 %v285
        %615 = vmatmul.mubr.f32.gmra.mxu0 %v284
        %v616 = vpop.f32.mrf.mxu0
        %v617 = vadd.f32 %v455, %v616
        %v618 = vpop.f32.mrf.mxu0
        %v619 = vadd.f32 %v459, %v618
        %620 = vmatprep.mubr.f32.mxu0 %v287
        %621 = vmatmul.mubr.f32.gmra.mxu0 %v286
        %v622 = vpop.f32.mrf.mxu0
        %v623 = vadd.f32 %v455, %v622
        %v624 = vpop.f32.mrf.mxu0
        %v625 = vadd.f32 %v459, %v624
        %626 = vmatprep.mubr.f32.mxu0 %v289
        %627 = vmatmul.mubr.f32.gmra.mxu0 %v288
        %v628 = vpop.f32.mrf.mxu0
        %v629 = vadd.f32 %v455, %v628
        %v630 = vpop.f32.mrf.mxu0
        %v631 = vadd.f32 %v459, %v630
        %632 = vmatprep.mubr.f32.mxu0 %v291
        %633 = vmatmul.mubr.f32.gmra.mxu0 %v290
        %v634 = vpop.f32.mrf.mxu0
        %v635 = vadd.f32 %v455, %v634
        %v636 = vpop.f32.mrf.mxu0
        %v637 = vadd.f32 %v459, %v636
        %638 = vmatprep.mubr.f32.mxu0 %v293
        %639 = vmatmul.mubr.f32.gmra.mxu0 %v292
        %v640 = vpop.f32.mrf.mxu0
        %v641 = vadd.f32 %v455, %v640
        %v642 = vpop.f32.mrf.mxu0
        %v643 = vadd.f32 %v459, %v642
        %644 = vmatprep.mubr.f32.mxu0 %v295
        %645 = vmatmul.mubr.f32.gmra.mxu0 %v294
        %v646 = vpop.f32.mrf.mxu0
        %v647 = vadd.f32 %v455, %v646
        %v648 = vpop.f32.mrf.mxu0
        %v649 = vadd.f32 %v459, %v648
        %650 = vmatprep.mubr.f32.mxu0 %v297
        %651 = vmatmul.mubr.f32.gmra.mxu0 %v296
        %v652 = vpop.f32.mrf.mxu0
        %v653 = vadd.f32 %v455, %v652
        %v654 = vpop.f32.mrf.mxu0
        %v655 = vadd.f32 %v459, %v654
        %656 = vmatprep.mubr.f32.mxu0 %v299
        %657 = vmatmul.mubr.f32.gmra.mxu0 %v298
        %v658 = vpop.f32.mrf.mxu0
        %v659 = vadd.f32 %v455, %v658
        %v660 = vpop.f32.mrf.mxu0
        %v661 = vadd.f32 %v459, %v660
        %662 = vmatprep.mubr.f32.mxu0 %v301
        %663 = vmatmul.mubr.f32.gmra.mxu0 %v300
        %v664 = vpop.f32.mrf.mxu0
        %v665 = vadd.f32 %v455, %v664
        %v666 = vpop.f32.mrf.mxu0
        %v667 = vadd.f32 %v459, %v666
        %668 = vmatprep.mubr.f32.mxu0 %v303
        %669 = vmatmul.mubr.f32.gmra.mxu0 %v302
        %v670 = vpop.f32.mrf.mxu0
        %v671 = vadd.f32 %v455, %v670
        %v672 = vpop.f32.mrf.mxu0
        %v673 = vadd.f32 %v459, %v672
        %674 = vmatprep.mubr.f32.mxu0 %v305
        %675 = vmatmul.mubr.f32.gmra.mxu0 %v304
        %v676 = vpop.f32.mrf.mxu0
        %v677 = vadd.f32 %v455, %v676
        %v678 = vpop.f32.mrf.mxu0
        %v679 = vadd.f32 %v459, %v678
        %680 = vmatprep.mubr.f32.mxu0 %v307
        %681 = vmatmul.mubr.f32.gmra.mxu0 %v306
        %v682 = vpop.f32.mrf.mxu0
        %v683 = vadd.f32 %v455, %v682
        %v684 = vpop.f32.mrf.mxu0
        %v685 = vadd.f32 %v459, %v684
        %686 = vmatprep.mubr.f32.mxu0 %v309
        %687 = vmatmul.mubr.f32.gmra.mxu0 %v308
        %v688 = vpop.f32.mrf.mxu0
        %v689 = vadd.f32 %v455, %v688
        %v690 = vpop.f32.mrf.mxu0
        %v691 = vadd.f32 %v459, %v690
        %692 = vmatprep.mubr.f32.mxu0 %v311
        %693 = vmatmul.mubr.f32.gmra.mxu0 %v310
        %v694 = vpop.f32.mrf.mxu0
        %v695 = vadd.f32 %v455, %v694
        %v696 = vpop.f32.mrf.mxu0
        %v697 = vadd.f32 %v459, %v696
        %698 = vmatprep.mubr.f32.mxu0 %v313
        %699 = vmatmul.mubr.f32.gmra.mxu0 %v312
        %v700 = vpop.f32.mrf.mxu0
        %v701 = vadd.f32 %v455, %v700
        %v702 = vpop.f32.mrf.mxu0
        %v703 = vadd.f32 %v459, %v702
        %704 = vmatprep.mubr.f32.mxu0 %v315
        %705 = vmatmul.mubr.f32.gmra.mxu0 %v314
        %v706 = vpop.f32.mrf.mxu0
        %v707 = vadd.f32 %v455, %v706
        %v708 = vpop.f32.mrf.mxu0
        %v709 = vadd.f32 %v459, %v708
        %710 = vmatprep.mubr.f32.mxu0 %v317
        %711 = vmatmul.mubr.f32.gmra.mxu0 %v316
        %v712 = vpop.f32.mrf.mxu0
        %v713 = vadd.f32 %v455, %v712
        %v714 = vpop.f32.mrf.mxu0
        %v715 = vadd.f32 %v459, %v714
        %716 = vmatprep.mubr.f32.mxu0 %v319
        %717 = vmatmul.mubr.f32.gmra.mxu0 %v318
        %v718 = vpop.f32.mrf.mxu0
        %v719 = vadd.f32 %v455, %v718
        %v720 = vpop.f32.mrf.mxu0
        %v721 = vadd.f32 %v459, %v720
        %722 = vmatprep.mubr.f32.mxu0 %v321
        %723 = vmatmul.mubr.f32.gmra.mxu0 %v320
        %v724 = vpop.f32.mrf.mxu0
        %v725 = vadd.f32 %v455, %v724
        %v726 = vpop.f32.mrf.mxu0
        %v727 = vadd.f32 %v459, %v726
        %728 = vdwg.mxu0
        %729 = vmatprep.subr.mxu0 %v385
        %730 = vmatpush1.msra.mxu0 %v384
        %731 = vmatprep.subr.mxu0 %v381
        %732 = vmatpush1.msra.mxu0 %v380
        %733 = vmatprep.subr.mxu0 %v377
        %734 = vmatpush1.msra.mxu0 %v376
        %735 = vmatprep.subr.mxu0 %v373
        %736 = vmatpush1.msra.mxu0 %v372
        %737 = vmatprep.subr.mxu0 %v369
        %738 = vmatpush1.msra.mxu0 %v368
        %739 = vmatprep.subr.mxu0 %v365
        %740 = vmatpush1.msra.mxu0 %v364
        %741 = vmatprep.subr.mxu0 %v361
        %742 = vmatpush1.msra.mxu0 %v360
        %743 = vmatprep.subr.mxu0 %v357
        %744 = vmatpush1.msra.mxu0 %v356
        %745 = vmatprep.subr.mxu0 %v353
        %746 = vmatpush1.msra.mxu0 %v352
        %747 = vmatprep.subr.mxu0 %v349
        %748 = vmatpush1.msra.mxu0 %v348
        %749 = vmatprep.subr.mxu0 %v345
        %750 = vmatpush1.msra.mxu0 %v344
        %751 = vmatprep.subr.mxu0 %v341
        %752 = vmatpush1.msra.mxu0 %v340
        %753 = vmatprep.subr.mxu0 %v337
        %754 = vmatpush1.msra.mxu0 %v336
        %755 = vmatprep.subr.mxu0 %v333
        %756 = vmatpush1.msra.mxu0 %v332
        %757 = vmatprep.subr.mxu0 %v329
        %758 = vmatpush1.msra.mxu0 %v328
        %759 = vmatprep.subr.mxu0 %v325
        %760 = vmatpush1.msra.mxu0 %v324
        %761 = vmatprep.subr.mxu0 %v449
        %762 = vmatpush2.msra.mxu0 %v448
        %763 = vmatprep.subr.mxu0 %v445
        %764 = vmatpush2.msra.mxu0 %v444
        %765 = vmatprep.subr.mxu0 %v441
        %766 = vmatpush2.msra.mxu0 %v440
        %767 = vmatprep.subr.mxu0 %v437
        %768 = vmatpush2.msra.mxu0 %v436
        %769 = vmatprep.subr.mxu0 %v433
        %770 = vmatpush2.msra.mxu0 %v432
        %771 = vmatprep.subr.mxu0 %v429
        %772 = vmatpush2.msra.mxu0 %v428
        %773 = vmatprep.subr.mxu0 %v425
        %774 = vmatpush2.msra.mxu0 %v424
        %775 = vmatprep.subr.mxu0 %v421
        %776 = vmatpush2.msra.mxu0 %v420
        %777 = vmatprep.subr.mxu0 %v417
        %778 = vmatpush2.msra.mxu0 %v416
        %779 = vmatprep.subr.mxu0 %v413
        %780 = vmatpush2.msra.mxu0 %v412
        %781 = vmatprep.subr.mxu0 %v409
        %782 = vmatpush2.msra.mxu0 %v408
        %783 = vmatprep.subr.mxu0 %v405
        %784 = vmatpush2.msra.mxu0 %v404
        %785 = vmatprep.subr.mxu0 %v401
        %786 = vmatpush2.msra.mxu0 %v400
        %787 = vmatprep.subr.mxu0 %v397
        %788 = vmatpush2.msra.mxu0 %v396
        %789 = vmatprep.subr.mxu0 %v393
        %790 = vmatpush2.msra.mxu0 %v392
        %791 = vmatprep.subr.mxu0 %v389
        %792 = vmatpush2.msra.mxu0 %v388
        %793 = vmatprep.mubr.f32.mxu0 %v259
        %794 = vmatmul.mubr.f32.gmra.mxu0 %v258
        %v795 = vpop.f32.mrf.mxu0
        %v796 = vadd.f32 %v463, %v795
        %v797 = vpop.f32.mrf.mxu0
        %v798 = vadd.f32 %v467, %v797
        %799 = vmatprep.mubr.f32.mxu0 %v261
        %800 = vmatmul.mubr.f32.gmra.mxu0 %v260
        %v801 = vpop.f32.mrf.mxu0
        %v802 = vadd.f32 %v463, %v801
        %v803 = vpop.f32.mrf.mxu0
        %v804 = vadd.f32 %v467, %v803
        %805 = vmatprep.mubr.f32.mxu0 %v263
        %806 = vmatmul.mubr.f32.gmra.mxu0 %v262
        %v807 = vpop.f32.mrf.mxu0
        %v808 = vadd.f32 %v463, %v807
        %v809 = vpop.f32.mrf.mxu0
        %v810 = vadd.f32 %v467, %v809
        %811 = vmatprep.mubr.f32.mxu0 %v265
        %812 = vmatmul.mubr.f32.gmra.mxu0 %v264
        %v813 = vpop.f32.mrf.mxu0
        %v814 = vadd.f32 %v463, %v813
        %v815 = vpop.f32.mrf.mxu0
        %v816 = vadd.f32 %v467, %v815
        %817 = vmatprep.mubr.f32.mxu0 %v267
        %818 = vmatmul.mubr.f32.gmra.mxu0 %v266
        %v819 = vpop.f32.mrf.mxu0
        %v820 = vadd.f32 %v463, %v819
        %v821 = vpop.f32.mrf.mxu0
        %v822 = vadd.f32 %v467, %v821
        %823 = vmatprep.mubr.f32.mxu0 %v269
        %824 = vmatmul.mubr.f32.gmra.mxu0 %v268
        %v825 = vpop.f32.mrf.mxu0
        %v826 = vadd.f32 %v463, %v825
        %v827 = vpop.f32.mrf.mxu0
        %v828 = vadd.f32 %v467, %v827
        %829 = vmatprep.mubr.f32.mxu0 %v271
        %830 = vmatmul.mubr.f32.gmra.mxu0 %v270
        %v831 = vpop.f32.mrf.mxu0
        %v832 = vadd.f32 %v463, %v831
        %v833 = vpop.f32.mrf.mxu0
        %v834 = vadd.f32 %v467, %v833
        %835 = vmatprep.mubr.f32.mxu0 %v273
        %836 = vmatmul.mubr.f32.gmra.mxu0 %v272
        %v837 = vpop.f32.mrf.mxu0
        %v838 = vadd.f32 %v463, %v837
        %v839 = vpop.f32.mrf.mxu0
        %v840 = vadd.f32 %v467, %v839
        %841 = vmatprep.mubr.f32.mxu0 %v275
        %842 = vmatmul.mubr.f32.gmra.mxu0 %v274
        %v843 = vpop.f32.mrf.mxu0
        %v844 = vadd.f32 %v463, %v843
        %v845 = vpop.f32.mrf.mxu0
        %v846 = vadd.f32 %v467, %v845
        %847 = vmatprep.mubr.f32.mxu0 %v277
        %848 = vmatmul.mubr.f32.gmra.mxu0 %v276
        %v849 = vpop.f32.mrf.mxu0
        %v850 = vadd.f32 %v463, %v849
        %v851 = vpop.f32.mrf.mxu0
        %v852 = vadd.f32 %v467, %v851
        %853 = vmatprep.mubr.f32.mxu0 %v279
        %854 = vmatmul.mubr.f32.gmra.mxu0 %v278
        %v855 = vpop.f32.mrf.mxu0
        %v856 = vadd.f32 %v463, %v855
        %v857 = vpop.f32.mrf.mxu0
        %v858 = vadd.f32 %v467, %v857
        %859 = vmatprep.mubr.f32.mxu0 %v281
        %860 = vmatmul.mubr.f32.gmra.mxu0 %v280
        %v861 = vpop.f32.mrf.mxu0
        %v862 = vadd.f32 %v463, %v861
        %v863 = vpop.f32.mrf.mxu0
        %v864 = vadd.f32 %v467, %v863
        %865 = vmatprep.mubr.f32.mxu0 %v283
        %866 = vmatmul.mubr.f32.gmra.mxu0 %v282
        %v867 = vpop.f32.mrf.mxu0
        %v868 = vadd.f32 %v463, %v867
        %v869 = vpop.f32.mrf.mxu0
        %v870 = vadd.f32 %v467, %v869
        %871 = vmatprep.mubr.f32.mxu0 %v285
        %872 = vmatmul.mubr.f32.gmra.mxu0 %v284
        %v873 = vpop.f32.mrf.mxu0
        %v874 = vadd.f32 %v463, %v873
        %v875 = vpop.f32.mrf.mxu0
        %v876 = vadd.f32 %v467, %v875
        %877 = vmatprep.mubr.f32.mxu0 %v287
        %878 = vmatmul.mubr.f32.gmra.mxu0 %v286
        %v879 = vpop.f32.mrf.mxu0
        %v880 = vadd.f32 %v463, %v879
        %v881 = vpop.f32.mrf.mxu0
        %v882 = vadd.f32 %v467, %v881
        %883 = vmatprep.mubr.f32.mxu0 %v289
        %884 = vmatmul.mubr.f32.gmra.mxu0 %v288
        %v885 = vpop.f32.mrf.mxu0
        %v886 = vadd.f32 %v463, %v885
        %v887 = vpop.f32.mrf.mxu0
        %v888 = vadd.f32 %v467, %v887
        %889 = vmatprep.mubr.f32.mxu0 %v291
        %890 = vmatmul.mubr.f32.gmra.mxu0 %v290
        %v891 = vpop.f32.mrf.mxu0
        %v892 = vadd.f32 %v463, %v891
        %v893 = vpop.f32.mrf.mxu0
        %v894 = vadd.f32 %v467, %v893
        %895 = vmatprep.mubr.f32.mxu0 %v293
        %896 = vmatmul.mubr.f32.gmra.mxu0 %v292
        %v897 = vpop.f32.mrf.mxu0
        %v898 = vadd.f32 %v463, %v897
        %v899 = vpop.f32.mrf.mxu0
        %v900 = vadd.f32 %v467, %v899
        %901 = vmatprep.mubr.f32.mxu0 %v295
        %902 = vmatmul.mubr.f32.gmra.mxu0 %v294
        %v903 = vpop.f32.mrf.mxu0
        %v904 = vadd.f32 %v463, %v903
        %v905 = vpop.f32.mrf.mxu0
        %v906 = vadd.f32 %v467, %v905
        %907 = vmatprep.mubr.f32.mxu0 %v297
        %908 = vmatmul.mubr.f32.gmra.mxu0 %v296
        %v909 = vpop.f32.mrf.mxu0
        %v910 = vadd.f32 %v463, %v909
        %v911 = vpop.f32.mrf.mxu0
        %v912 = vadd.f32 %v467, %v911
        %913 = vmatprep.mubr.f32.mxu0 %v299
        %914 = vmatmul.mubr.f32.gmra.mxu0 %v298
        %v915 = vpop.f32.mrf.mxu0
        %v916 = vadd.f32 %v463, %v915
        %v917 = vpop.f32.mrf.mxu0
        %v918 = vadd.f32 %v467, %v917
        %919 = vmatprep.mubr.f32.mxu0 %v301
        %920 = vmatmul.mubr.f32.gmra.mxu0 %v300
        %v921 = vpop.f32.mrf.mxu0
        %v922 = vadd.f32 %v463, %v921
        %v923 = vpop.f32.mrf.mxu0
        %v924 = vadd.f32 %v467, %v923
        %925 = vmatprep.mubr.f32.mxu0 %v303
        %926 = vmatmul.mubr.f32.gmra.mxu0 %v302
        %v927 = vpop.f32.mrf.mxu0
        %v928 = vadd.f32 %v463, %v927
        %v929 = vpop.f32.mrf.mxu0
        %v930 = vadd.f32 %v467, %v929
        %931 = vmatprep.mubr.f32.mxu0 %v305
        %932 = vmatmul.mubr.f32.gmra.mxu0 %v304
        %v933 = vpop.f32.mrf.mxu0
        %v934 = vadd.f32 %v463, %v933
        %v935 = vpop.f32.mrf.mxu0
        %v936 = vadd.f32 %v467, %v935
        %937 = vmatprep.mubr.f32.mxu0 %v307
        %938 = vmatmul.mubr.f32.gmra.mxu0 %v306
        %v939 = vpop.f32.mrf.mxu0
        %v940 = vadd.f32 %v463, %v939
        %v941 = vpop.f32.mrf.mxu0
        %v942 = vadd.f32 %v467, %v941
        %943 = vmatprep.mubr.f32.mxu0 %v309
        %944 = vmatmul.mubr.f32.gmra.mxu0 %v308
        %v945 = vpop.f32.mrf.mxu0
        %v946 = vadd.f32 %v463, %v945
        %v947 = vpop.f32.mrf.mxu0
        %v948 = vadd.f32 %v467, %v947
        %949 = vmatprep.mubr.f32.mxu0 %v311
        %950 = vmatmul.mubr.f32.gmra.mxu0 %v310
        %v951 = vpop.f32.mrf.mxu0
        %v952 = vadd.f32 %v463, %v951
        %v953 = vpop.f32.mrf.mxu0
        %v954 = vadd.f32 %v467, %v953
        %955 = vmatprep.mubr.f32.mxu0 %v313
        %956 = vmatmul.mubr.f32.gmra.mxu0 %v312
        %v957 = vpop.f32.mrf.mxu0
        %v958 = vadd.f32 %v463, %v957
        %v959 = vpop.f32.mrf.mxu0
        %v960 = vadd.f32 %v467, %v959
        %961 = vmatprep.mubr.f32.mxu0 %v315
        %962 = vmatmul.mubr.f32.gmra.mxu0 %v314
        %v963 = vpop.f32.mrf.mxu0
        %v964 = vadd.f32 %v463, %v963
        %v965 = vpop.f32.mrf.mxu0
        %v966 = vadd.f32 %v467, %v965
        %967 = vmatprep.mubr.f32.mxu0 %v317
        %968 = vmatmul.mubr.f32.gmra.mxu0 %v316
        %v969 = vpop.f32.mrf.mxu0
        %v970 = vadd.f32 %v463, %v969
        %v971 = vpop.f32.mrf.mxu0
        %v972 = vadd.f32 %v467, %v971
        %973 = vmatprep.mubr.f32.mxu0 %v319
        %974 = vmatmul.mubr.f32.gmra.mxu0 %v318
        %v975 = vpop.f32.mrf.mxu0
        %v976 = vadd.f32 %v463, %v975
        %v977 = vpop.f32.mrf.mxu0
        %v978 = vadd.f32 %v467, %v977
        %979 = vmatprep.mubr.f32.mxu0 %v321
        %980 = vmatmul.mubr.f32.gmra.mxu0 %v320
        %v981 = vpop.f32.mrf.mxu0
        %v982 = vadd.f32 %v463, %v981
        %v983 = vpop.f32.mrf.mxu0
        %v984 = vadd.f32 %v467, %v983
        %985 = vdwg.mxu0
        %986 = vst [vmem:[%s247] sm:$0xff] %v539
        %987 = vst [vmem:[%s247 + $0x8] sm:$0xff] %v545
        %988 = vst [vmem:[%s247 + $0x10] sm:$0xff] %v551
        %989 = vst [vmem:[%s247 + $0x18] sm:$0xff] %v557
        %990 = vst [vmem:[%s247 + $0x20] sm:$0xff] %v563
        %991 = vst [vmem:[%s247 + $0x28] sm:$0xff] %v569
        %992 = vst [vmem:[%s247 + $0x30] sm:$0xff] %v575
        %993 = vst [vmem:[%s247 + $0x38] sm:$0xff] %v581
        %994 = vst [vmem:[%s247 + $0x40] sm:$0xff] %v587
        %995 = vst [vmem:[%s247 + $0x48] sm:$0xff] %v593
        %996 = vst [vmem:[%s247 + $0x50] sm:$0xff] %v599
        %997 = vst [vmem:[%s247 + $0x58] sm:$0xff] %v605
        %998 = vst [vmem:[%s247 + $0x60] sm:$0xff] %v611
        %999 = vst [vmem:[%s247 + $0x68] sm:$0xff] %v617
        %1000 = vst [vmem:[%s247 + $0x70] sm:$0xff] %v623
        %1001 = vst [vmem:[%s247 + $0x78] sm:$0xff] %v629
        %1002 = vst [vmem:[%s247 + $0x80] sm:$0xff] %v635
        %1003 = vst [vmem:[%s247 + $0x88] sm:$0xff] %v641
        %1004 = vst [vmem:[%s247 + $0x90] sm:$0xff] %v647
        %1005 = vst [vmem:[%s247 + $0x98] sm:$0xff] %v653
        %1006 = vst [vmem:[%s247 + $0xa0] sm:$0xff] %v659
        %1007 = vst [vmem:[%s247 + $0xa8] sm:$0xff] %v665
        %1008 = vst [vmem:[%s247 + $0xb0] sm:$0xff] %v671
        %1009 = vst [vmem:[%s247 + $0xb8] sm:$0xff] %v677
        %1010 = vst [vmem:[%s247 + $0xc0] sm:$0xff] %v683
        %1011 = vst [vmem:[%s247 + $0xc8] sm:$0xff] %v689
        %1012 = vst [vmem:[%s247 + $0xd0] sm:$0xff] %v695
        %1013 = vst [vmem:[%s247 + $0xd8] sm:$0xff] %v701
        %1014 = vst [vmem:[%s247 + $0xe0] sm:$0xff] %v707
        %1015 = vst [vmem:[%s247 + $0xe8] sm:$0xff] %v713
        %1016 = vst [vmem:[%s247 + $0xf0] sm:$0xff] %v719
        %1017 = vst [vmem:[%s247 + $0xf8] sm:$0xff] %v725
        %1018 = vst [vmem:[%s254] sm:$0xff] %v541
        %1019 = vst [vmem:[%s254 + $0x8] sm:$0xff] %v796
        %1020 = vst [vmem:[%s254 + $0x10] sm:$0xff] %v798
        %1021 = vst [vmem:[%s254 + $0x18] sm:$0xff] %v547
        %1022 = vst [vmem:[%s254 + $0x20] sm:$0xff] %v802
        %1023 = vst [vmem:[%s254 + $0x28] sm:$0xff] %v804
        %1024 = vst [vmem:[%s254 + $0x30] sm:$0xff] %v553
        %1025 = vst [vmem:[%s254 + $0x38] sm:$0xff] %v808
        %1026 = vst [vmem:[%s254 + $0x40] sm:$0xff] %v810
        %1027 = vst [vmem:[%s254 + $0x48] sm:$0xff] %v559
        %1028 = vst [vmem:[%s254 + $0x50] sm:$0xff] %v814
        %1029 = vst [vmem:[%s254 + $0x58] sm:$0xff] %v816
        %1030 = vst [vmem:[%s254 + $0x60] sm:$0xff] %v565
        %1031 = vst [vmem:[%s254 + $0x68] sm:$0xff] %v820
        %1032 = vst [vmem:[%s254 + $0x70] sm:$0xff] %v822
        %1033 = vst [vmem:[%s254 + $0x78] sm:$0xff] %v571
        %1034 = vst [vmem:[%s254 + $0x80] sm:$0xff] %v826
        %1035 = vst [vmem:[%s254 + $0x88] sm:$0xff] %v828
        %1036 = vst [vmem:[%s254 + $0x90] sm:$0xff] %v577
        %1037 = vst [vmem:[%s254 + $0x98] sm:$0xff] %v832
        %1038 = vst [vmem:[%s254 + $0xa0] sm:$0xff] %v834
        %1039 = vst [vmem:[%s254 + $0xa8] sm:$0xff] %v583
        %1040 = vst [vmem:[%s254 + $0xb0] sm:$0xff] %v838
        %1041 = vst [vmem:[%s254 + $0xb8] sm:$0xff] %v840
        %1042 = vst [vmem:[%s254 + $0xc0] sm:$0xff] %v589
        %1043 = vst [vmem:[%s254 + $0xc8] sm:$0xff] %v844
        %1044 = vst [vmem:[%s254 + $0xd0] sm:$0xff] %v846
        %1045 = vst [vmem:[%s254 + $0xd8] sm:$0xff] %v595
        %1046 = vst [vmem:[%s254 + $0xe0] sm:$0xff] %v850
        %1047 = vst [vmem:[%s254 + $0xe8] sm:$0xff] %v852
        %1048 = vst [vmem:[%s254 + $0xf0] sm:$0xff] %v601
        %1049 = vst [vmem:[%s254 + $0xf8] sm:$0xff] %v856
        %1050 = vst [vmem:[%s254 + $0x100] sm:$0xff] %v858
        %1051 = vst [vmem:[%s254 + $0x108] sm:$0xff] %v607
        %1052 = vst [vmem:[%s254 + $0x110] sm:$0xff] %v862
        %1053 = vst [vmem:[%s254 + $0x118] sm:$0xff] %v864
        %1054 = vst [vmem:[%s254 + $0x120] sm:$0xff] %v613
        %1055 = vst [vmem:[%s254 + $0x128] sm:$0xff] %v868
        %1056 = vst [vmem:[%s254 + $0x130] sm:$0xff] %v870
        %1057 = vst [vmem:[%s254 + $0x138] sm:$0xff] %v619
        %1058 = vst [vmem:[%s254 + $0x140] sm:$0xff] %v874
        %1059 = vst [vmem:[%s254 + $0x148] sm:$0xff] %v876
        %1060 = vst [vmem:[%s254 + $0x150] sm:$0xff] %v625
        %1061 = vst [vmem:[%s254 + $0x158] sm:$0xff] %v880
        %1062 = vst [vmem:[%s254 + $0x160] sm:$0xff] %v882
        %1063 = vst [vmem:[%s254 + $0x168] sm:$0xff] %v631
        %1064 = vst [vmem:[%s254 + $0x170] sm:$0xff] %v886
        %1065 = vst [vmem:[%s254 + $0x178] sm:$0xff] %v888
        %1066 = vst [vmem:[%s254 + $0x180] sm:$0xff] %v637
        %1067 = vst [vmem:[%s254 + $0x188] sm:$0xff] %v892
        %1068 = vst [vmem:[%s254 + $0x190] sm:$0xff] %v894
        %1069 = vst [vmem:[%s254 + $0x198] sm:$0xff] %v643
        %1070 = vst [vmem:[%s254 + $0x1a0] sm:$0xff] %v898
        %1071 = vst [vmem:[%s254 + $0x1a8] sm:$0xff] %v900
        %1072 = vst [vmem:[%s254 + $0x1b0] sm:$0xff] %v649
        %1073 = vst [vmem:[%s254 + $0x1b8] sm:$0xff] %v904
        %1074 = vst [vmem:[%s254 + $0x1c0] sm:$0xff] %v906
        %1075 = vst [vmem:[%s254 + $0x1c8] sm:$0xff] %v655
        %1076 = vst [vmem:[%s254 + $0x1d0] sm:$0xff] %v910
        %1077 = vst [vmem:[%s254 + $0x1d8] sm:$0xff] %v912
        %1078 = vst [vmem:[%s254 + $0x1e0] sm:$0xff] %v661
        %1079 = vst [vmem:[%s254 + $0x1e8] sm:$0xff] %v916
        %1080 = vst [vmem:[%s254 + $0x1f0] sm:$0xff] %v918
        %1081 = vst [vmem:[%s254 + $0x1f8] sm:$0xff] %v667
        %1082 = vst [vmem:[%s254 + $0x200] sm:$0xff] %v922
        %1083 = vst [vmem:[%s254 + $0x208] sm:$0xff] %v924
        %1084 = vst [vmem:[%s254 + $0x210] sm:$0xff] %v673
        %1085 = vst [vmem:[%s254 + $0x218] sm:$0xff] %v928
        %1086 = vst [vmem:[%s254 + $0x220] sm:$0xff] %v930
        %1087 = vst [vmem:[%s254 + $0x228] sm:$0xff] %v679
        %1088 = vst [vmem:[%s254 + $0x230] sm:$0xff] %v934
        %1089 = vst [vmem:[%s254 + $0x238] sm:$0xff] %v936
        %1090 = vst [vmem:[%s254 + $0x240] sm:$0xff] %v685
        %1091 = vst [vmem:[%s254 + $0x248] sm:$0xff] %v940
        %1092 = vst [vmem:[%s254 + $0x250] sm:$0xff] %v942
        %1093 = vst [vmem:[%s254 + $0x258] sm:$0xff] %v691
        %1094 = vst [vmem:[%s254 + $0x260] sm:$0xff] %v946
        %1095 = vst [vmem:[%s254 + $0x268] sm:$0xff] %v948
        %1096 = vst [vmem:[%s254 + $0x270] sm:$0xff] %v697
        %1097 = vst [vmem:[%s254 + $0x278] sm:$0xff] %v952
        %1098 = vst [vmem:[%s254 + $0x280] sm:$0xff] %v954
        %1099 = vst [vmem:[%s254 + $0x288] sm:$0xff] %v703
        %1100 = vst [vmem:[%s254 + $0x290] sm:$0xff] %v958
        %1101 = vst [vmem:[%s254 + $0x298] sm:$0xff] %v960
        %1102 = vst [vmem:[%s254 + $0x2a0] sm:$0xff] %v709
        %1103 = vst [vmem:[%s254 + $0x2a8] sm:$0xff] %v964
        %1104 = vst [vmem:[%s254 + $0x2b0] sm:$0xff] %v966
        %1105 = vst [vmem:[%s254 + $0x2b8] sm:$0xff] %v715
        %1106 = vst [vmem:[%s254 + $0x2c0] sm:$0xff] %v970
        %1107 = vst [vmem:[%s254 + $0x2c8] sm:$0xff] %v972
        %1108 = vst [vmem:[%s254 + $0x2d0] sm:$0xff] %v721
        %1109 = vst [vmem:[%s254 + $0x2d8] sm:$0xff] %v976
        %1110 = vst [vmem:[%s254 + $0x2e0] sm:$0xff] %v978
        %1111 = vst [vmem:[%s254 + $0x2e8] sm:$0xff] %v727
        %1112 = vst [vmem:[%s254 + $0x2f0] sm:$0xff] %v982
        %1113 = vst [vmem:[%s254 + $0x2f8] sm:$0xff] %v984
        %s1114 = sand.u32 %s102, 1
        %s1115 = scalar_lea.sflag [#allocation4], %s1114
        %s1116 = sand.u32 %s102, 1
        %s1117 = smul.addr %s1116, 256
        %s1118 = scalar_lea.vmem [#allocation8], %s1117
        %s1119 = sand.u32 %s128, 1
        %s1120 = scalar_lea.sflag [#allocation10], %s1119
        %s1121 = sand.u32 %s128, 1
        %s1122 = smul.addr %s1121, 768
        %s1123 = scalar_lea.vmem [#allocation9], %s1122
        // Predicated region
        $region45: #{tpu_custom_call.1} parent=31 // pred_check
          %p1124 = pneg %p112
        $region46: #{tpu_custom_call.1} parent=31 // pred_check_branch
          %1126 = sbr.rel (%p1124) target = $region48
        $region47: #{tpu_custom_call.1} parent=31 // pred_region
          %s1127 = smul.u32 32, %s26
          %s1129 = ssub.s32 4096, 4096
          %1130 = vsyncadd %s1115, %s1129
          %s1131 = smul.addr %s1127, 128
          %s1132 = scalar_lea.hbm %s3, %s1131
          %s1133 = sshll.u32 %s1118, 4
          %s1134 = int_to_ptr.vmem [resolvable:$true] %s1133
          %1139 = dma.vmem_to_hbm [thread:$0]  %s1134, 4096, %s1132, %s1115, 128, 128, 8
        $region48: #{tpu_custom_call.1} parent=31 // pred_fallthru
          _
        // Predicated region
        $region49: #{tpu_custom_call.1} parent=31 // pred_check
          %p1140 = pneg %p138
        $region50: #{tpu_custom_call.1} parent=31 // pred_check_branch
          %1142 = sbr.rel (%p1140) target = $region52
        $region51: #{tpu_custom_call.1} parent=31 // pred_region
          %s1143 = smul.u32 32, %s26
          %s1145 = ssub.s32 12288, 12288
          %1146 = vsyncadd %s1120, %s1145
          %s1147 = smul.addr %s1143, 3
          %s1148 = smul.addr %s1147, 128
          %s1149 = scalar_lea.hbm %s4, %s1148
          %s1150 = sshll.u32 %s1123, 4
          %s1151 = int_to_ptr.vmem [resolvable:$true] %s1150
          %1156 = dma.vmem_to_hbm [thread:$0]  %s1151, 12288, %s1149, %s1120, 384, 384, 24
        $region52: #{tpu_custom_call.1} parent=31 // pred_fallthru
          _
      $region32: #{tpu_custom_call.1} parent=5 // pred_fallthru
        _
      %p1157 = scmp.le.s32.totalorder 2, %s21
      // Predicated region
      $region53: #{tpu_custom_call.1} parent=5 // pred_check
        %p1158 = pneg %p1157
      $region54: #{tpu_custom_call.1} parent=5 // pred_check_branch
        %1160 = sbr.rel (%p1158) target = $region56
      $region55: #{tpu_custom_call.1} parent=5 // pred_region
        %s1161 = ssub.s32 %s21, 2
        // Predicated region
        $region57: #{tpu_custom_call.1} parent=55 // pred_check
          %p1162 = pneg %p118
        $region58: #{tpu_custom_call.1} parent=55 // pred_check_branch
          %1164 = sbr.rel (%p1162) target = $region60
        $region59: #{tpu_custom_call.1} parent=55 // pred_region
          %s1165 = sand.u32 %s103, 1
          %s1166 = scalar_lea.sflag [#allocation4], %s1165
          %s1167 = sand.u32 %s103, 1
          %s1168 = smul.addr %s1167, 256
          %s1169 = scalar_lea.vmem [#allocation8], %s1168
          %1170 = dma.done %s1166, 4096
        $region60: #{tpu_custom_call.1} parent=55 // pred_fallthru
          _
        // Predicated region
        $region61: #{tpu_custom_call.1} parent=55 // pred_check
          %p1171 = pneg %p144
        $region62: #{tpu_custom_call.1} parent=55 // pred_check_branch
          %1173 = sbr.rel (%p1171) target = $region64
        $region63: #{tpu_custom_call.1} parent=55 // pred_region
          %s1174 = sand.u32 %s129, 1
          %s1175 = scalar_lea.sflag [#allocation10], %s1174
          %s1176 = sand.u32 %s129, 1
          %s1177 = smul.addr %s1176, 768
          %s1178 = scalar_lea.vmem [#allocation9], %s1177
          %1179 = dma.done %s1175, 12288
        $region64: #{tpu_custom_call.1} parent=55 // pred_fallthru
          _
      $region56: #{tpu_custom_call.1} parent=5 // pred_fallthru
        _
    $region6: #{tpu_custom_call.1} parent=1 // loop_footer
      %s25 = sadd.s32 1, %s21
    $region7: #{tpu_custom_call.1} parent=1 // loop_footer_branch
      %20 = sbr.rel target = $region3
    $region8: #{tpu_custom_call.1} parent=1 // loop_exit
      _
    %1180 = vsyncpa [#allocation3], 1
    %s1181 = scalar_lea.sflag [#allocation3], 1
    %1182 = vsyncpa %s1181, 1
    %1183 = vsyncpa [#allocation6], 1
    %1184 = vsyncpa [#allocation4], 1
    %s1185 = scalar_lea.sflag [#allocation4], 1
    %1186 = vsyncpa %s1185, 1
    %1187 = vsyncpa [#allocation10], 1
    %s1188 = scalar_lea.sflag [#allocation10], 1
    %1189 = vsyncpa %s1188, 1

</llo_original>
